<compile_context>
chip_gen: v7x
topology: tpu7x:2x2x1
jax: 0.10.0
libtpu: 0.0.40
codegen_flags: <defaults>
</compile_context>

<pallas_src>
import functools

import jax
import jax.numpy as jnp
from jax.experimental import pallas as pl
from jax.experimental.pallas import tpu as pltpu


def _rope_kernel(cos_ref, sin_even_ref, sin_odd_ref, x_ref, o_ref):
    # cos/sin_even/sin_odd: (1, TC) f32 tables; x_ref/o_ref: (TB, TC) tiles.
    x = x_ref[...]
    n = x.shape[-1]                        # static tile width (even, pair-aligned)

    # Adjacent-neighbour fetch at full lane width (XLU rolls, free slot).
    # pltpu.roll follows jnp.roll convention: roll(x, 1)[i] = x[i-1],
    # roll(x, n-1)[i] = x[i+1].  Wrap lanes hit a zero entry of the
    # opposite-parity sin table, so they never contribute.
    nxt = pltpu.roll(x, shift=n - 1, axis=1)   # x[i+1]
    prv = pltpu.roll(x, shift=1, axis=1)       # x[i-1]

    # out[2k]   = cos_k * x[2k]   - sin_k * x[2k+1]
    # out[2k+1] = cos_k * x[2k+1] + sin_k * x[2k]
    out = (x.astype(jnp.float32) * cos_ref[...]
           + nxt.astype(jnp.float32) * sin_even_ref[...]
           + prv.astype(jnp.float32) * sin_odd_ref[...])
    o_ref[...] = out.astype(o_ref.dtype)


def _divisors(n: int):
    ds = set()
    i = 1
    while i * i <= n:
        if n % i == 0:
            ds.add(i)
            ds.add(n // i)
        i += 1
    return sorted(ds)


def _choose_tiles(bh: int, ld: int, itemsize: int,
                  target_bytes: int = 4 << 20, lane_cap: int = 16384):
    """Pick (row_tile, lane_tile) targeting ~4 MiB blocks under (8,128) rules."""
    # Lane (minor) tile: largest multiple-of-128 divisor of LD up to the cap,
    # or the full row when LD isn't 128-aligned (full-dim blocks are allowed).
    if ld % 128 != 0:
        tc = ld
    else:
        cands = [d for d in _divisors(ld) if d % 128 == 0 and d <= lane_cap]
        tc = max(cands) if cands else ld
    # Row (second-minor) tile: largest multiple-of-8 divisor of BH that keeps
    # the block near the byte target (or BH itself when BH isn't 8-aligned).
    target_rows = max(8, target_bytes // max(1, tc * itemsize))
    if bh < 8 or bh % 8 != 0:
        tb = bh
    else:
        cands = [d for d in _divisors(bh) if d % 8 == 0]
        under = [d for d in cands if d <= target_rows]
        tb = max(under) if under else min(cands)
    return tb, tc


@functools.lru_cache(maxsize=32)
def _rope_tables(L: int, D: int, theta: float):
    """Interleaved lane-dense (1, L*D) f32 tables, built once per (L, D, theta)."""
    LD = L * D
    inv_freq = theta ** (-(jnp.arange(0, D, 2, dtype=jnp.float32) / D))     # (D/2,)
    ang = jnp.arange(L, dtype=jnp.float32)[:, None] * inv_freq[None, :]     # (L, D/2)
    cos = jnp.cos(ang)
    sin = jnp.sin(ang)
    zeros = jnp.zeros_like(sin)
    cos_t = jnp.repeat(cos, 2, axis=-1).reshape(1, LD)                      # (1, L*D)
    sin_even_t = jnp.stack([-sin, zeros], axis=-1).reshape(1, LD)           # -sin on even lanes
    sin_odd_t = jnp.stack([zeros, sin], axis=-1).reshape(1, LD)             # +sin on odd lanes
    return (jax.device_put(cos_t), jax.device_put(sin_even_t),
            jax.device_put(sin_odd_t))


def rotary_embedding(x: jax.Array, theta: float = 10000.0) -> jax.Array:
    """Apply RotaryEmbedding(d=x.shape[-1]) to x of shape (B, H, L, D)."""
    B, H, L, D = x.shape
    assert D % 2 == 0
    BH, LD = B * H, L * D
    xf = x.reshape(BH, LD)

    cos_t, sin_even_t, sin_odd_t = _rope_tables(L, D, float(theta))

    TB, TC = _choose_tiles(BH, LD, jnp.dtype(x.dtype).itemsize)
    grid = (LD // TC, BH // TB)     # BH axis innermost -> table blocks stay resident

    out = pl.pallas_call(
        _rope_kernel,
        out_shape=jax.ShapeDtypeStruct((BH, LD), x.dtype),
        grid_spec=pltpu.PrefetchScalarGridSpec(
            num_scalar_prefetch=0,
            grid=grid,
            in_specs=[
                pl.BlockSpec((1, TC), lambda j, b: (0, j)),    # cos table (BH-invariant)
                pl.BlockSpec((1, TC), lambda j, b: (0, j)),    # -sin on even lanes
                pl.BlockSpec((1, TC), lambda j, b: (0, j)),    # +sin on odd lanes
                pl.BlockSpec((TB, TC), lambda j, b: (b, j)),   # x
            ],
            out_specs=pl.BlockSpec((TB, TC), lambda j, b: (b, j)),
        ),
        compiler_params=pltpu.CompilerParams(
            dimension_semantics=("parallel", "parallel"),
            vmem_limit_bytes=48 << 20),
    )(cos_t, sin_even_t, sin_odd_t, xf)
    return out.reshape(B, H, L, D)


def rotary_embedding_ref(x: jax.Array, theta: float = 10000.0) -> jax.Array:
    """Pure-JAX reference mirroring the PyTorch module."""
    *lead, L, D = x.shape
    freqs = theta ** (-(jnp.arange(0, D, 2, dtype=jnp.float32) / D))   # (D/2,)
    ang = jnp.arange(L, dtype=jnp.float32)[:, None] * freqs[None, :]   # (L, D/2)
    cos, sin = jnp.cos(ang), jnp.sin(ang)
    x0 = x[..., 0::2]
    x1 = x[..., 1::2]
    o0 = cos * x0 - sin * x1
    o1 = sin * x0 + cos * x1
    return jnp.stack([o0, o1], axis=-1).reshape(x.shape).astype(x.dtype)


if __name__ == "__main__":
    key = jax.random.PRNGKey(0)
    B, H, L, D = 2, 4, 16, 32
    x = jax.random.normal(key, (B, H, L, D), dtype=jnp.float32)

    out = jax.block_until_ready(rotary_embedding(x))
    ref = rotary_embedding_ref(x)

    assert out.shape == x.shape and out.dtype == x.dtype
    assert jnp.allclose(out, ref, atol=1e-5, rtol=1e-5), "mismatch vs reference"

    print("KERNEL_OK")
</pallas_src>

<mosaic_0001>
module attributes {stable_mosaic.version = 11 : i64} {
  func.func @_rope_kernel(%arg0: i32, %arg1: i32, %arg2: memref<1x512xf32, #tpu.memory_space<vmem>>, %arg3: memref<1x512xf32, #tpu.memory_space<vmem>>, %arg4: memref<1x512xf32, #tpu.memory_space<vmem>>, %arg5: memref<8x512xf32, #tpu.memory_space<vmem>>, %arg6: memref<8x512xf32, #tpu.memory_space<vmem>>) attributes {dimension_semantics = [#tpu.dimension_semantics<parallel>, #tpu.dimension_semantics<parallel>], iteration_bounds = array<i64: 1, 1>, scalar_prefetch = 0 : i64, scratch_operands = 0 : i64, tpu.core_type = #tpu.core_type<tc>, window_params = [{transform_indices = @transform_0, window_bounds = array<i64: 1, 512>}, {transform_indices = @transform_1, window_bounds = array<i64: 1, 512>}, {transform_indices = @transform_2, window_bounds = array<i64: 1, 512>}, {transform_indices = @transform_3, window_bounds = array<i64: 8, 512>}, {transform_indices = @transform_4, window_bounds = array<i64: 8, 512>}]} {
    %c0 = arith.constant 0 : index
    %c0_0 = arith.constant 0 : index
    %0 = vector.load %arg5[%c0, %c0_0] : memref<8x512xf32, #tpu.memory_space<vmem>>, vector<8x512xf32>
    %c511_i32 = arith.constant 511 : i32
    %1 = tpu.dynamic_rotate %0 by %c511_i32 dim 1 : vector<8x512xf32>, i32 -> vector<8x512xf32>
    %c1_i32 = arith.constant 1 : i32
    %2 = tpu.dynamic_rotate %0 by %c1_i32 dim 1 : vector<8x512xf32>, i32 -> vector<8x512xf32>
    %c0_1 = arith.constant 0 : index
    %c0_2 = arith.constant 0 : index
    %3 = vector.load %arg2[%c0_1, %c0_2] : memref<1x512xf32, #tpu.memory_space<vmem>>, vector<1x512xf32>
    %4 = vector.broadcast %3 : vector<1x512xf32> to vector<8x512xf32>
    %5 = arith.mulf %0, %4 : vector<8x512xf32>
    %c0_3 = arith.constant 0 : index
    %c0_4 = arith.constant 0 : index
    %6 = vector.load %arg3[%c0_3, %c0_4] : memref<1x512xf32, #tpu.memory_space<vmem>>, vector<1x512xf32>
    %7 = vector.broadcast %6 : vector<1x512xf32> to vector<8x512xf32>
    %8 = arith.mulf %1, %7 : vector<8x512xf32>
    %9 = arith.addf %5, %8 : vector<8x512xf32>
    %c0_5 = arith.constant 0 : index
    %c0_6 = arith.constant 0 : index
    %10 = vector.load %arg4[%c0_5, %c0_6] : memref<1x512xf32, #tpu.memory_space<vmem>>, vector<1x512xf32>
    %11 = vector.broadcast %10 : vector<1x512xf32> to vector<8x512xf32>
    %12 = arith.mulf %2, %11 : vector<8x512xf32>
    %13 = arith.addf %9, %12 : vector<8x512xf32>
    %c0_7 = arith.constant 0 : index
    %c0_8 = arith.constant 0 : index
    %14 = vector.load %arg6[%c0_7, %c0_8] : memref<8x512xf32, #tpu.memory_space<vmem>>, vector<8x512xf32>
    tpu.vector_store %arg6[%c0_7, %c0_8], %13 {strides = array<i32>} : memref<8x512xf32, #tpu.memory_space<vmem>>, vector<8x512xf32>,
    return
  }
  func.func @transform_0(%arg0: i32, %arg1: i32) -> (i32, i32) {
    %c0_i32 = arith.constant 0 : i32
    %c0_i32_0 = arith.constant 0 : i32
    return %c0_i32, %arg0 : i32, i32
  }
  func.func @transform_1(%arg0: i32, %arg1: i32) -> (i32, i32) {
    %c0_i32 = arith.constant 0 : i32
    %c0_i32_0 = arith.constant 0 : i32
    return %c0_i32, %arg0 : i32, i32
  }
  func.func @transform_2(%arg0: i32, %arg1: i32) -> (i32, i32) {
    %c0_i32 = arith.constant 0 : i32
    %c0_i32_0 = arith.constant 0 : i32
    return %c0_i32, %arg0 : i32, i32
  }
  func.func @transform_3(%arg0: i32, %arg1: i32) -> (i32, i32) {
    %c0_i32 = arith.constant 0 : i32
    return %arg1, %arg0 : i32, i32
  }
  func.func @transform_4(%arg0: i32, %arg1: i32) -> (i32, i32) {
    %c0_i32 = arith.constant 0 : i32
    return %arg1, %arg0 : i32, i32
  }
}

</mosaic_0001>

<llo_original>
// kernel: tpu_custom_call.1
$region0: #{tpu_custom_call.1}
  #allocation0 [shape = 'u32[]', space=smem, size = 0x4, offset = 0x4, fixed_abs, tag = 'smem constant byte address 0x4 - core index']
  #allocation1 [shape = 'u32[144,128]{1,0:T(1,128)}', space=vmem, size = 0x12000, scoped, tag = 'internal scratch']
  %s0 = inlined_call_operand.hbm [shape: f32[1,512], index: 0, kind: input, shape index: {}]
  %s1 = inlined_call_operand.hbm [shape: f32[1,512], index: 1, kind: input, shape index: {}]
  %s2 = inlined_call_operand.vmem [shape: f32[1,512], index: 2, kind: input, shape index: {}]
  %s3 = inlined_call_operand.hbm [shape: f32[8,512], index: 3, kind: input, shape index: {}]
  %s4 = inlined_call_operand.hbm [shape: f32[8,512], index: 4, kind: output, shape index: {}]
  %s5 = sld [smem:[#allocation0]]
  $region38: #{tpu_custom_call.1} parent=0
    _
  %s7 = ssub.s32 1, %s5
  %s8 = scalar_select 0, %s7, %s5
  $region1: #{tpu_custom_call.1} parent=0
    #allocation2 [shape = 'u8[2048]{0}', space=vmem, size = 0x800, scoped, tag = 'input window, operand 0, single buffered']
    #allocation3 [shape = 's32[1]{0}', space=sflag, size = 0x4, scoped, tag = 'scoped memory for tpu_custom_call.1']
    #allocation4 [shape = 's32[1]{0}', space=sflag, size = 0x4, scoped, tag = 'scoped memory for tpu_custom_call.1']
    #allocation5 [shape = 'u8[2048]{0}', space=vmem, size = 0x800, scoped, tag = 'input window, operand 1, single buffered']
    #allocation6 [shape = 's32[1]{0}', space=sflag, size = 0x4, scoped, tag = 'scoped memory for tpu_custom_call.1']
    #allocation7 [shape = 'u8[16384]{0}', space=vmem, size = 0x4000, scoped, tag = 'input window, operand 3, single buffered']
    #allocation8 [shape = 'u8[16384]{0}', space=vmem, size = 0x4000, scoped, tag = 'output window, operand 0, single buffered']
    %9 = vsyncpa [#allocation3], 0
    %10 = vsyncpa [#allocation6], 0
    %11 = vsyncpa [#allocation4], 0
    // Predicated region
    $region2: #{tpu_custom_call.1} parent=1 // pred_check
      _
    $region3: #{tpu_custom_call.1} parent=1 // pred_check_branch
      %13 = sbr.rel (0) target = $region5
    $region4: #{tpu_custom_call.1} parent=1 // pred_region
      %s15 = ssub.s32 64, 64
      %16 = vsyncadd [#allocation3], %s15
      %s18 = sshll.u32 [#allocation2], 4
      %s19 = int_to_ptr.vmem [resolvable:$true] %s18
      %21 = dma.hbm_to_vmem [thread:$0]  %s0, 64, %s19, [#allocation3]
    $region5: #{tpu_custom_call.1} parent=1 // pred_fallthru
      _
    // Predicated region
    $region6: #{tpu_custom_call.1} parent=1 // pred_check
      _
    $region7: #{tpu_custom_call.1} parent=1 // pred_check_branch
      %23 = sbr.rel (0) target = $region9
    $region8: #{tpu_custom_call.1} parent=1 // pred_region
      %s25 = ssub.s32 64, 64
      %26 = vsyncadd [#allocation6], %s25
      %s28 = sshll.u32 [#allocation5], 4
      %s29 = int_to_ptr.vmem [resolvable:$true] %s28
      %31 = dma.hbm_to_vmem [thread:$0]  %s1, 64, %s29, [#allocation6]
    $region9: #{tpu_custom_call.1} parent=1 // pred_fallthru
      _
    // Predicated region
    $region10: #{tpu_custom_call.1} parent=1 // pred_check
      _
    $region11: #{tpu_custom_call.1} parent=1 // pred_check_branch
      %33 = sbr.rel (0) target = $region13
    $region12: #{tpu_custom_call.1} parent=1 // pred_region
      _
    $region13: #{tpu_custom_call.1} parent=1 // pred_fallthru
      _
    // Predicated region
    $region14: #{tpu_custom_call.1} parent=1 // pred_check
      _
    $region15: #{tpu_custom_call.1} parent=1 // pred_check_branch
      %35 = sbr.rel (0) target = $region17
    $region16: #{tpu_custom_call.1} parent=1 // pred_region
      %s37 = ssub.s32 512, 512
      %38 = vsyncadd [#allocation6], %s37
      %s40 = sshll.u32 [#allocation7], 4
      %s41 = int_to_ptr.vmem [resolvable:$true] %s40
      %43 = dma.hbm_to_vmem [thread:$0]  %s3, 512, %s41, [#allocation6]
    $region17: #{tpu_custom_call.1} parent=1 // pred_fallthru
      _
    // Predicated region
    $region18: #{tpu_custom_call.1} parent=1 // pred_check
      _
    $region19: #{tpu_custom_call.1} parent=1 // pred_check_branch
      %45 = sbr.rel (0) target = $region21
    $region20: #{tpu_custom_call.1} parent=1 // pred_region
      %46 = dma.done [#allocation3], 64
    $region21: #{tpu_custom_call.1} parent=1 // pred_fallthru
      _
    // Predicated region
    $region22: #{tpu_custom_call.1} parent=1 // pred_check
      _
    $region23: #{tpu_custom_call.1} parent=1 // pred_check_branch
      %48 = sbr.rel (0) target = $region25
    $region24: #{tpu_custom_call.1} parent=1 // pred_region
      %49 = dma.done [#allocation6], 64
    $region25: #{tpu_custom_call.1} parent=1 // pred_fallthru
      _
    // Predicated region
    $region26: #{tpu_custom_call.1} parent=1 // pred_check
      _
    $region27: #{tpu_custom_call.1} parent=1 // pred_check_branch
      %51 = sbr.rel (0) target = $region29
    $region28: #{tpu_custom_call.1} parent=1 // pred_region
      %52 = dma.done [#allocation6], 512
    $region29: #{tpu_custom_call.1} parent=1 // pred_fallthru
      _
    %v53 = vld [vmem:[#allocation7] sm:$0xff]
    %v54 = vld [vmem:[#allocation7 + $0x8] sm:$0xff]
    %v55 = vld [vmem:[#allocation7 + $0x10] sm:$0xff]
    %v56 = vld [vmem:[#allocation7 + $0x18] sm:$0xff]
    %57 = vrot.lane.b32.xlu0 %v53, 127
    %v58 = vpop.permute.xlu0 %57
    %59 = vrot.lane.b32.xlu0 %v54, 127
    %v60 = vpop.permute.xlu0 %59
    %61 = vrot.lane.b32.xlu0 %v55, 127
    %v62 = vpop.permute.xlu0 %61
    %63 = vrot.lane.b32.xlu0 %v56, 127
    %v64 = vpop.permute.xlu0 %63
    %v65 = vlaneseq
    %v66 = vand.u32 %v65, 127
    %vm67 = vcmp.lt.s32.totalorder %v66, 127
    %v68 = vsel %vm67, %v62, %v64
    %v69 = vsel %vm67, %v60, %v62
    %v70 = vsel %vm67, %v58, %v60
    %v71 = vsel %vm67, %v64, %v58
    %72 = vrot.lane.b32.xlu0 %v53, 1
    %v73 = vpop.permute.xlu0 %72
    %74 = vrot.lane.b32.xlu0 %v54, 1
    %v75 = vpop.permute.xlu0 %74
    %76 = vrot.lane.b32.xlu0 %v55, 1
    %v77 = vpop.permute.xlu0 %76
    %78 = vrot.lane.b32.xlu0 %v56, 1
    %v79 = vpop.permute.xlu0 %78
    %vm80 = vcmp.lt.s32.totalorder %v66, 1
    %v81 = vsel %vm80, %v77, %v79
    %v82 = vsel %vm80, %v75, %v77
    %v83 = vsel %vm80, %v73, %v75
    %v84 = vsel %vm80, %v79, %v73
    %v85 = vld [vmem:[#allocation2] sm:$0xf]
    %v87 = vlaneseq
    %v88 = vshrl.u32 %v87, 7
    %v89 = vsub.s32 0, %v88
    %v90 = vrot.slane %v85, %v89
    %v91 = vlaneseq
    %v92 = vshrl.u32 %v91, 7
    %v93 = vsub.s32 1, %v92
    %v94 = vrot.slane %v85, %v93
    %v95 = vlaneseq
    %v96 = vshrl.u32 %v95, 7
    %v97 = vsub.s32 2, %v96
    %v98 = vrot.slane %v85, %v97
    %v99 = vlaneseq
    %v100 = vshrl.u32 %v99, 7
    %v101 = vsub.s32 3, %v100
    %v102 = vrot.slane %v85, %v101
    %v107 = vmul.f32 %v53, %v90
    %v108 = vmul.f32 %v54, %v94
    %v109 = vmul.f32 %v55, %v98
    %v110 = vmul.f32 %v56, %v102
    %v111 = vld [vmem:[#allocation5] sm:$0xf]
    %v113 = vlaneseq
    %v114 = vshrl.u32 %v113, 7
    %v115 = vsub.s32 0, %v114
    %v116 = vrot.slane %v111, %v115
    %v117 = vlaneseq
    %v118 = vshrl.u32 %v117, 7
    %v119 = vsub.s32 1, %v118
    %v120 = vrot.slane %v111, %v119
    %v121 = vlaneseq
    %v122 = vshrl.u32 %v121, 7
    %v123 = vsub.s32 2, %v122
    %v124 = vrot.slane %v111, %v123
    %v125 = vlaneseq
    %v126 = vshrl.u32 %v125, 7
    %v127 = vsub.s32 3, %v126
    %v128 = vrot.slane %v111, %v127
    %v133 = vmul.f32 %v70, %v116
    %v134 = vmul.f32 %v69, %v120
    %v135 = vmul.f32 %v68, %v124
    %v136 = vmul.f32 %v71, %v128
    %v137 = vadd.f32 %v107, %v133
    %v138 = vadd.f32 %v108, %v134
    %v139 = vadd.f32 %v109, %v135
    %v140 = vadd.f32 %v110, %v136
    %v141 = vld [vmem:[%s2] sm:$0xf]
    %v143 = vlaneseq
    %v144 = vshrl.u32 %v143, 7
    %v145 = vsub.s32 0, %v144
    %v146 = vrot.slane %v141, %v145
    %v147 = vlaneseq
    %v148 = vshrl.u32 %v147, 7
    %v149 = vsub.s32 1, %v148
    %v150 = vrot.slane %v141, %v149
    %v151 = vlaneseq
    %v152 = vshrl.u32 %v151, 7
    %v153 = vsub.s32 2, %v152
    %v154 = vrot.slane %v141, %v153
    %v155 = vlaneseq
    %v156 = vshrl.u32 %v155, 7
    %v157 = vsub.s32 3, %v156
    %v158 = vrot.slane %v141, %v157
    %v163 = vmul.f32 %v84, %v146
    %v164 = vmul.f32 %v83, %v150
    %v165 = vmul.f32 %v82, %v154
    %v166 = vmul.f32 %v81, %v158
    %v167 = vadd.f32 %v137, %v163
    %v168 = vadd.f32 %v138, %v164
    %v169 = vadd.f32 %v139, %v165
    %v170 = vadd.f32 %v140, %v166
    %171 = vst [vmem:[#allocation8] sm:$0xff] %v167
    %172 = vst [vmem:[#allocation8 + $0x8] sm:$0xff] %v168
    %173 = vst [vmem:[#allocation8 + $0x10] sm:$0xff] %v169
    %174 = vst [vmem:[#allocation8 + $0x18] sm:$0xff] %v170
    // Predicated region
    $region30: #{tpu_custom_call.1} parent=1 // pred_check
      _
    $region31: #{tpu_custom_call.1} parent=1 // pred_check_branch
      %176 = sbr.rel (0) target = $region33
    $region32: #{tpu_custom_call.1} parent=1 // pred_region
      %s178 = ssub.s32 512, 512
      %179 = vsyncadd [#allocation4], %s178
      %s181 = sshll.u32 [#allocation8], 4
      %s182 = int_to_ptr.vmem [resolvable:$true] %s181
      %184 = dma.vmem_to_hbm [thread:$0]  %s182, 512, %s4, [#allocation4]
    $region33: #{tpu_custom_call.1} parent=1 // pred_fallthru
      _
    // Predicated region
    $region34: #{tpu_custom_call.1} parent=1 // pred_check
      _
    $region35: #{tpu_custom_call.1} parent=1 // pred_check_branch
      %186 = sbr.rel (0) target = $region37
    $region36: #{tpu_custom_call.1} parent=1 // pred_region
      %187 = dma.done [#allocation4], 512
    $region37: #{tpu_custom_call.1} parent=1 // pred_fallthru
      _
    %188 = vsyncpa [#allocation3], 1
    %189 = vsyncpa [#allocation6], 1
    %190 = vsyncpa [#allocation4], 1

</llo_original>
